<compile_context>
chip_gen: v7x
topology: tpu7x:2x2x1
jax: 0.10.0
libtpu: 0.0.40
codegen_flags: <defaults>
</compile_context>

<pallas_src>
import functools

import jax
import jax.numpy as jnp
from jax import lax
from jax.experimental import pallas as pl
from jax.experimental.pallas import tpu as pltpu

NEG_BIG = -1e12  # -1000000000000.0 in the reference module


def _round_up(v, m):
    return ((v + m - 1) // m) * m


def _sim_mask_kernel(x_ref, xt_ref, throw_ref, out_ref, *, sim):
    """Per-batch-element kernel.

    x_ref:     (1, Lp, Dp)  all tokens (zero-padded to lane-dense shapes)
    xt_ref:    (1, Ltp, Dp) thrown tokens only (zero-padded rows)
    throw_ref: (1, 1, Lp)   indicator (1.0 where token index is in ids_throw)
    out_ref:   (1, 1, Lp)   "Sim_chose_mask" core (before the leading zero column)

    out[j] = -1e12 * (#{i thrown : cos(x_i, x_j) > sim} + throw[j])
    which matches:
        Sim_chose      = Sim_matrix[ids_throw, :]
        Sim_chose_mask = ((Sim_chose > sim) * -1e12).sum(over thrown rows)
        Sim_chose_mask[ids_throw] += -1e12
    """
    x = x_ref[0].astype(jnp.float32)          # (Lp, Dp)
    xt = xt_ref[0].astype(jnp.float32)        # (Ltp, Dp)
    throw = throw_ref[0].astype(jnp.float32)  # (1, Lp)

    def _row_normalize(v):
        # zero-guarded rsqrt: padded (all-zero) rows stay exactly zero instead of
        # producing NaNs; for real zero-norm rows the net effect (never counted as
        # similar) matches the torch reference's NaN > sim == False behavior.
        ss = jnp.sum(v * v, axis=-1, keepdims=True)
        inv = jnp.where(ss > 0.0, lax.rsqrt(ss), 0.0)
        return (v * inv).astype(jnp.bfloat16)  # bf16 only for the MXU operands

    x_n = _row_normalize(x)     # (Lp, Dp)  unit rows (0 for padded rows)
    xt_n = _row_normalize(xt)   # (Ltp, Dp)

    # cos(thrown_i, token_j): contract on D directly (no explicit transpose),
    # bf16 in, f32 accumulate on the MXU.
    s = lax.dot_general(
        xt_n, x_n,
        dimension_numbers=(((1,), (1,)), ((), ())),
        preferred_element_type=jnp.float32)     # (Ltp, Lp)

    # counts[j] = #{thrown i : cos(i, j) > sim}; compare/select/reduce stays f32
    # on the VPU/XLU (no second matmul, no (L,L) temp).
    counts = jnp.sum((s > sim).astype(jnp.float32), axis=0, keepdims=True)  # (1, Lp)

    out_ref[0] = ((counts + throw) * NEG_BIG).astype(out_ref.dtype)


def sim_chose_mask(x_tokens, x_throw, throw_ind, sim):
    """x_tokens: (N, L, D), x_throw: (N, L_throw, D), throw_ind: (N, L)
    -> (N, L) Sim_chose_mask core."""
    N, L, D = x_tokens.shape
    _, Lt, _ = x_throw.shape

    # lane-dense padding (output last dim and MXU N-dim multiples of 128)
    Lp = _round_up(L, 128)
    Dp = _round_up(D, 128)
    Ltp = _round_up(max(Lt, 8), 8)

    x_p = jnp.zeros((N, Lp, Dp), x_tokens.dtype).at[:, :L, :D].set(x_tokens)
    xt_p = jnp.zeros((N, Ltp, Dp), x_tokens.dtype).at[:, :Lt, :D].set(x_throw)
    throw_p = jnp.zeros((N, 1, Lp), x_tokens.dtype).at[:, 0, :L].set(
        throw_ind.astype(x_tokens.dtype))

    # One batch element per grid step ("parallel" -> shardable across TCs on v7x).
    # For very large L (>= ~2048) the (Ltp, Lp) f32 temp should additionally be
    # column-tiled to respect v7x's 64 MiB VMEM; not needed at ViT-scale L.
    kernel = functools.partial(_sim_mask_kernel, sim=sim)
    out = pl.pallas_call(
        kernel,
        out_shape=jax.ShapeDtypeStruct((N, 1, Lp), x_tokens.dtype),
        grid_spec=pltpu.PrefetchScalarGridSpec(
            num_scalar_prefetch=0,
            grid=(N,),
            in_specs=[
                pl.BlockSpec((1, Lp, Dp), lambda n: (n, 0, 0)),
                pl.BlockSpec((1, Ltp, Dp), lambda n: (n, 0, 0)),
                pl.BlockSpec((1, 1, Lp), lambda n: (n, 0, 0)),
            ],
            out_specs=pl.BlockSpec((1, 1, Lp), lambda n: (n, 0, 0)),
        ),
        compiler_params=pltpu.CompilerParams(
            dimension_semantics=("parallel",)),
    )(x_p, xt_p, throw_p)
    return out.reshape(N, Lp)[:, :L]


def patch_dropout_forward(x, *, prob, rng_key, sim=0.95,
                          exclude_first_token=True, training=True):
    """JAX/Pallas port of PatchDropout.forward.

    Returns x unchanged in eval / prob==0, else (x_kept, attn_mask_enc, mask_ratio).
    Note: the output sequence length (min_p) is data-dependent, so it is resolved
    on the host (this function is not meant to be wrapped in a single jit).
    """
    if (not training) or prob == 0.0:
        return x

    if exclude_first_token:
        cls_tokens, x_tok = x[:, :1], x[:, 1:]
    else:
        cls_tokens = x[:, :1]
        x_tok = x

    N, L, D = x_tok.shape
    len_keep = int(L * (1 - prob))

    # noise / shuffle (torch.rand + argsort equivalent)
    noise = jax.random.uniform(rng_key, (N, L), dtype=jnp.float32)
    ids_shuffle = jnp.argsort(noise, axis=1)
    ids_throw = ids_shuffle[:, len_keep:]                         # (N, L - len_keep)

    # gather thrown tokens (static shape) + indicator of thrown indices
    x_throw = jnp.take_along_axis(x_tok, ids_throw[:, :, None], axis=1)
    throw_ind = jnp.zeros((N, L), x.dtype).at[
        jnp.arange(N)[:, None], ids_throw].set(1.0)

    # --- Pallas hot path: thrown-vs-all cosine similarity + thresholded reduce ---
    core = sim_chose_mask(x_tok, x_throw, throw_ind, sim)         # (N, L)

    Sim_chose_mask = jnp.concatenate(
        [jnp.zeros((N, 1), x.dtype), core], axis=1)               # (N, L+1)
    attn_mask = Sim_chose_mask[:, :, None] + Sim_chose_mask[:, None, :]  # (N, L+1, L+1)

    mask = (Sim_chose_mask != 0)[:, 1:].astype(x.dtype)           # (N, L)

    # data-dependent kept length -> host-side int (mirrors .item() in torch)
    min_p = L - int(jnp.min(jnp.sum(mask, axis=-1)))
    indices = jnp.argsort(mask, axis=-1)
    ids_keep = indices[:, :min_p]                                 # (N, min_p)

    x_kept = jnp.take_along_axis(x_tok, ids_keep[:, :, None], axis=1)   # (N, min_p, D)

    ids_attn = jnp.concatenate(
        [jnp.zeros((N, 1), ids_keep.dtype), ids_keep + 1], axis=1)      # (N, min_p+1)
    attn_mask_enc = jnp.take_along_axis(attn_mask, ids_attn[:, :, None], axis=1)
    attn_mask_enc = jnp.take_along_axis(attn_mask_enc, ids_attn[:, None, :], axis=2)

    mask_ratio = jnp.sum(mask) / N / L

    if exclude_first_token:
        x_out = jnp.concatenate([cls_tokens, x_kept], axis=1)
    else:
        x_out = x_kept
    return x_out, attn_mask_enc, mask_ratio


if __name__ == "__main__":
    key = jax.random.PRNGKey(0)
    kx, knoise = jax.random.split(key)

    # small ViT-like shapes: batch=2, 1 cls token + 16 patch tokens, hidden=32
    N, L_total, D = 2, 17, 32
    x = jax.random.normal(kx, (N, L_total, D), dtype=jnp.float32)

    out_x, attn_mask_enc, mask_ratio = patch_dropout_forward(
        x, prob=0.5, rng_key=knoise, sim=0.95,
        exclude_first_token=True, training=True)

    jax.block_until_ready((out_x, attn_mask_enc, mask_ratio))

    # sanity: shapes follow the reference semantics
    assert out_x.shape[0] == N and out_x.shape[2] == D
    assert attn_mask_enc.shape == (N, out_x.shape[1], out_x.shape[1])
    print("KERNEL_OK")
</pallas_src>

<mosaic_0001>
module attributes {stable_mosaic.version = 11 : i64} {
  func.func @_sim_mask_kernel(%arg0: i32, %arg1: memref<1x128x128xf32, #tpu.memory_space<vmem>>, %arg2: memref<1x8x128xf32, #tpu.memory_space<vmem>>, %arg3: memref<1x1x128xf32, #tpu.memory_space<vmem>>, %arg4: memref<1x1x128xf32, #tpu.memory_space<vmem>>) attributes {dimension_semantics = [#tpu.dimension_semantics<parallel>], iteration_bounds = array<i64: 2>, scalar_prefetch = 0 : i64, scratch_operands = 0 : i64, tpu.core_type = #tpu.core_type<tc>, window_params = [{transform_indices = @transform_0, window_bounds = array<i64: 1, 128, 128>}, {transform_indices = @transform_1, window_bounds = array<i64: 1, 8, 128>}, {transform_indices = @transform_2, window_bounds = array<i64: 1, 1, 128>}, {transform_indices = @transform_3, window_bounds = array<i64: 1, 1, 128>}]} {
    %c0 = arith.constant 0 : index
    %c0_0 = arith.constant 0 : index
    %c0_1 = arith.constant 0 : index
    %0 = vector.load %arg1[%c0, %c0_0, %c0_1] : memref<1x128x128xf32, #tpu.memory_space<vmem>>, vector<1x128x128xf32>
    %1 = vector.shape_cast %0 : vector<1x128x128xf32> to vector<128x128xf32>
    %c0_2 = arith.constant 0 : index
    %c0_3 = arith.constant 0 : index
    %c0_4 = arith.constant 0 : index
    %2 = vector.load %arg2[%c0_2, %c0_3, %c0_4] : memref<1x8x128xf32, #tpu.memory_space<vmem>>, vector<1x8x128xf32>
    %3 = vector.shape_cast %2 : vector<1x8x128xf32> to vector<8x128xf32>
    %c0_5 = arith.constant 0 : index
    %c0_6 = arith.constant 0 : index
    %c0_7 = arith.constant 0 : index
    %4 = vector.load %arg3[%c0_5, %c0_6, %c0_7] : memref<1x1x128xf32, #tpu.memory_space<vmem>>, vector<1x1x128xf32>
    %5 = vector.shape_cast %4 : vector<1x1x128xf32> to vector<1x128xf32>
    %6 = arith.mulf %1, %1 : vector<128x128xf32>
    %cst = arith.constant dense<0.000000e+00> : vector<128xf32>
    %7 = vector.multi_reduction <add>, %6, %cst [1] : vector<128x128xf32> to vector<128xf32>
    %8 = vector.shape_cast %7 : vector<128xf32> to vector<128x1xf32>
    %cst_8 = arith.constant 0.000000e+00 : f32
    %9 = vector.broadcast %cst_8 : f32 to vector<128x1xf32>
    %10 = arith.cmpf ogt, %8, %9 : vector<128x1xf32>
    %11 = math.rsqrt %8 : vector<128x1xf32>
    %cst_9 = arith.constant 0.000000e+00 : f32
    %12 = vector.broadcast %cst_9 : f32 to vector<128x1xf32>
    %13 = arith.select %10, %11, %12 : vector<128x1xi1>, vector<128x1xf32>
    %14 = vector.broadcast %13 : vector<128x1xf32> to vector<128x128xf32>
    %15 = arith.mulf %1, %14 : vector<128x128xf32>
    %16 = arith.truncf %15 : vector<128x128xf32> to vector<128x128xbf16>
    %17 = arith.mulf %3, %3 : vector<8x128xf32>
    %cst_10 = arith.constant dense<0.000000e+00> : vector<8xf32>
    %18 = vector.multi_reduction <add>, %17, %cst_10 [1] : vector<8x128xf32> to vector<8xf32>
    %19 = vector.shape_cast %18 : vector<8xf32> to vector<8x1xf32>
    %cst_11 = arith.constant 0.000000e+00 : f32
    %20 = vector.broadcast %cst_11 : f32 to vector<8x1xf32>
    %21 = arith.cmpf ogt, %19, %20 : vector<8x1xf32>
    %22 = math.rsqrt %19 : vector<8x1xf32>
    %cst_12 = arith.constant 0.000000e+00 : f32
    %23 = vector.broadcast %cst_12 : f32 to vector<8x1xf32>
    %24 = arith.select %21, %22, %23 : vector<8x1xi1>, vector<8x1xf32>
    %25 = vector.broadcast %24 : vector<8x1xf32> to vector<8x128xf32>
    %26 = arith.mulf %3, %25 : vector<8x128xf32>
    %27 = arith.truncf %26 : vector<8x128xf32> to vector<8x128xbf16>
    %cst_13 = arith.constant dense<0.000000e+00> : vector<8x128xf32>
    %28 = tpu.matmul %27, %16, %cst_13 {dimension_numbers = #tpu.dot_dimension_numbers<[1], [1], [0], [0], [0, 0, 1, 0], [], []>} : vector<8x128xbf16>, vector<128x128xbf16>, vector<8x128xf32> -> vector<8x128xf32>
    %cst_14 = arith.constant 0.949999988 : f32
    %29 = vector.broadcast %cst_14 : f32 to vector<8x128xf32>
    %30 = arith.cmpf ogt, %28, %29 : vector<8x128xf32>
    %31 = arith.extui %30 : vector<8x128xi1> to vector<8x128xi32>
    %32 = arith.sitofp %31 : vector<8x128xi32> to vector<8x128xf32>
    %cst_15 = arith.constant dense<0.000000e+00> : vector<128xf32>
    %33 = vector.multi_reduction <add>, %32, %cst_15 [0] : vector<8x128xf32> to vector<128xf32>
    %34 = vector.shape_cast %33 : vector<128xf32> to vector<1x128xf32>
    %35 = arith.addf %34, %5 : vector<1x128xf32>
    %cst_16 = arith.constant -9.99999995E+11 : f32
    %36 = vector.broadcast %cst_16 : f32 to vector<1x128xf32>
    %37 = arith.mulf %35, %36 : vector<1x128xf32>
    %c0_17 = arith.constant 0 : index
    %c0_18 = arith.constant 0 : index
    %c0_19 = arith.constant 0 : index
    %38 = vector.load %arg4[%c0_17, %c0_18, %c0_19] : memref<1x1x128xf32, #tpu.memory_space<vmem>>, vector<1x1x128xf32>
    %39 = vector.shape_cast %38 : vector<1x1x128xf32> to vector<1x128xf32>
    %40 = vector.shape_cast %37 : vector<1x128xf32> to vector<1x1x128xf32>
    tpu.vector_store %arg4[%c0_17, %c0_18, %c0_19], %40 {strides = array<i32>} : memref<1x1x128xf32, #tpu.memory_space<vmem>>, vector<1x1x128xf32>,
    return
  }
  func.func @transform_0(%arg0: i32) -> (i32, i32, i32) {
    %c0_i32 = arith.constant 0 : i32
    %c0_i32_0 = arith.constant 0 : i32
    %c0_i32_1 = arith.constant 0 : i32
    return %arg0, %c0_i32, %c0_i32_0 : i32, i32, i32
  }
  func.func @transform_1(%arg0: i32) -> (i32, i32, i32) {
    %c0_i32 = arith.constant 0 : i32
    %c0_i32_0 = arith.constant 0 : i32
    %c0_i32_1 = arith.constant 0 : i32
    return %arg0, %c0_i32, %c0_i32_0 : i32, i32, i32
  }
  func.func @transform_2(%arg0: i32) -> (i32, i32, i32) {
    %c0_i32 = arith.constant 0 : i32
    %c0_i32_0 = arith.constant 0 : i32
    %c0_i32_1 = arith.constant 0 : i32
    return %arg0, %c0_i32, %c0_i32_0 : i32, i32, i32
  }
  func.func @transform_3(%arg0: i32) -> (i32, i32, i32) {
    %c0_i32 = arith.constant 0 : i32
    %c0_i32_0 = arith.constant 0 : i32
    %c0_i32_1 = arith.constant 0 : i32
    return %arg0, %c0_i32, %c0_i32_0 : i32, i32, i32
  }
}

</mosaic_0001>

<llo_original>
// kernel: tpu_custom_call.1
$region0: #{tpu_custom_call.1}
  #allocation0 [shape = 'u32[]', space=smem, size = 0x4, offset = 0x4, fixed_abs, tag = 'smem constant byte address 0x4 - core index']
  #allocation1 [shape = 'u32[144,128]{1,0:T(1,128)}', space=vmem, size = 0x12000, scoped, tag = 'internal scratch']
  %s0 = inlined_call_operand.hbm [shape: f32[2,128,128], index: 0, kind: input, shape index: {}]
  %s1 = inlined_call_operand.hbm [shape: f32[2,8,128], index: 1, kind: input, shape index: {}]
  %s2 = inlined_call_operand.vmem [shape: f32[2,1,128], index: 2, kind: input, shape index: {}]
  %s3 = inlined_call_operand.hbm [shape: f32[2,1,128], index: 3, kind: output, shape index: {}]
  %s4 = sld [smem:[#allocation0]]
  $region53: #{tpu_custom_call.1} parent=0
    _
  %s6 = ssub.s32 1, %s4
  %s7 = scalar_select 0, %s6, %s4
  $region1: #{tpu_custom_call.1} parent=0
    #allocation2 [shape = 'u8[131072]{0}', space=vmem, size = 0x20000, scoped, tag = 'input window, operand 0']
    #allocation3 [shape = 's32[2]{0}', space=sflag, size = 0x8, scoped, tag = 'scoped memory for tpu_custom_call.1']
    #allocation4 [shape = 's32[2]{0}', space=sflag, size = 0x8, scoped, tag = 'scoped memory for tpu_custom_call.1']
    #allocation5 [shape = 'u8[8192]{0}', space=vmem, size = 0x2000, scoped, tag = 'input window, operand 1']
    #allocation6 [shape = 's32[2]{0}', space=sflag, size = 0x8, scoped, tag = 'scoped memory for tpu_custom_call.1']
    #allocation7 [shape = 'u8[1024]{0}', space=vmem, size = 0x400, scoped, tag = 'output window, operand 0']
    %8 = vsyncpa [#allocation3], 0
    %s9 = scalar_lea.sflag [#allocation3], 1
    %10 = vsyncpa %s9, 0
    %11 = vsyncpa [#allocation6], 0
    %s12 = scalar_lea.sflag [#allocation6], 1
    %13 = vsyncpa %s12, 0
    %14 = vsyncpa [#allocation4], 0
    %s15 = scalar_lea.sflag [#allocation4], 1
    %16 = vsyncpa %s15, 0
    loop: start=0, step=1, limit=4
    $region2: #{tpu_custom_call.1} parent=1 // loop_pre_header
      _
    $region3: #{tpu_custom_call.1} parent=1 // loop_header
      %s18 = sphi 0, %s22
      %p19 = scmp.ge.s32.totalorder %s18, 4
      %s28 = sphi 0, %s30
      %s31 = sphi 0, %s28
      %s32 = sphi 0, %s31
      %s48 = sphi 0, %s32
      %s54 = sphi 0, %s56
      %s57 = sphi 0, %s54
      %s58 = sphi 0, %s57
      %s74 = sphi 0, %s58
      %s80 = sphi 0, %s82
      %s83 = sphi 0, %s80
      %s84 = sphi 0, %s83
      %s100 = sphi 0, %s84
      %s106 = sphi 0, %s108
      %s109 = sphi 0, %s106
      %s110 = sphi 0, %s109
      %s126 = sphi 0, %s110
    $region4: #{tpu_custom_call.1} parent=1 // loop_header_branch
      %21 = sbr.rel (%p19) target = $region8
    $region5: #{tpu_custom_call.1} parent=1 // loop_body
      %s23 = ssub.s32 %s18, 1
      %s24 = ssub.s32 %s18, 2
      %s25 = sadd.s32 %s18, 1
      %s26 = ssub.s32 %s18, %s25
      %p27 = scmp.eq.s32.totalorder %s26, 0
      %s29 = sadd.s32 %s28, 1
      %s30 = scalar_select %p27, %s28, %s29
      %p33 = pneg %p27
      %p34 = scmp.eq.s32.totalorder %s18, 1
      %p35 = por %p33, %p34
      %p36 = scmp.ne.s32.totalorder %s28, %s31
      %p37 = scmp.eq.s32.totalorder %s18, 0
      %p38 = por %p36, %p37
      %p39 = scmp.ne.s32.totalorder %s28, %s31
      %p40 = scmp.eq.s32.totalorder %s23, 1
      %p41 = por %p39, %p40
      %p42 = scmp.ne.s32.totalorder %s31, %s32
      %p43 = scmp.eq.s32.totalorder %s23, 0
      %p44 = por %p42, %p43
      %p45 = scmp.ne.s32.totalorder %s31, %s32
      %p46 = scmp.eq.s32.totalorder %s24, 1
      %p47 = por %p45, %p46
      %p49 = scmp.ne.s32.totalorder %s32, %s48
      %p50 = scmp.eq.s32.totalorder %s24, 0
      %p51 = por %p49, %p50
      %s52 = ssub.s32 %s18, %s25
      %p53 = scmp.eq.s32.totalorder %s52, 0
      %s55 = sadd.s32 %s54, 1
      %s56 = scalar_select %p53, %s54, %s55
      %p59 = pneg %p53
      %p60 = scmp.eq.s32.totalorder %s18, 1
      %p61 = por %p59, %p60
      %p62 = scmp.ne.s32.totalorder %s54, %s57
      %p63 = scmp.eq.s32.totalorder %s18, 0
      %p64 = por %p62, %p63
      %p65 = scmp.ne.s32.totalorder %s54, %s57
      %p66 = scmp.eq.s32.totalorder %s23, 1
      %p67 = por %p65, %p66
      %p68 = scmp.ne.s32.totalorder %s57, %s58
      %p69 = scmp.eq.s32.totalorder %s23, 0
      %p70 = por %p68, %p69
      %p71 = scmp.ne.s32.totalorder %s57, %s58
      %p72 = scmp.eq.s32.totalorder %s24, 1
      %p73 = por %p71, %p72
      %p75 = scmp.ne.s32.totalorder %s58, %s74
      %p76 = scmp.eq.s32.totalorder %s24, 0
      %p77 = por %p75, %p76
      %s78 = ssub.s32 %s18, %s25
      %p79 = scmp.eq.s32.totalorder %s78, 0
      %s81 = sadd.s32 %s80, 1
      %s82 = scalar_select %p79, %s80, %s81
      %p85 = pneg %p79
      %p86 = scmp.eq.s32.totalorder %s18, 1
      %p87 = por %p85, %p86
      %p88 = scmp.ne.s32.totalorder %s80, %s83
      %p89 = scmp.eq.s32.totalorder %s18, 0
      %p90 = por %p88, %p89
      %p91 = scmp.ne.s32.totalorder %s80, %s83
      %p92 = scmp.eq.s32.totalorder %s23, 1
      %p93 = por %p91, %p92
      %p94 = scmp.ne.s32.totalorder %s83, %s84
      %p95 = scmp.eq.s32.totalorder %s23, 0
      %p96 = por %p94, %p95
      %p97 = scmp.ne.s32.totalorder %s83, %s84
      %p98 = scmp.eq.s32.totalorder %s24, 1
      %p99 = por %p97, %p98
      %p101 = scmp.ne.s32.totalorder %s84, %s100
      %p102 = scmp.eq.s32.totalorder %s24, 0
      %p103 = por %p101, %p102
      %s104 = ssub.s32 %s18, %s25
      %p105 = scmp.eq.s32.totalorder %s104, 0
      %s107 = sadd.s32 %s106, 1
      %s108 = scalar_select %p105, %s106, %s107
      %p111 = pneg %p105
      %p112 = scmp.eq.s32.totalorder %s18, 1
      %p113 = por %p111, %p112
      %p114 = scmp.ne.s32.totalorder %s106, %s109
      %p115 = scmp.eq.s32.totalorder %s18, 0
      %p116 = por %p114, %p115
      %p117 = scmp.ne.s32.totalorder %s106, %s109
      %p118 = scmp.eq.s32.totalorder %s23, 1
      %p119 = por %p117, %p118
      %p120 = scmp.ne.s32.totalorder %s109, %s110
      %p121 = scmp.eq.s32.totalorder %s23, 0
      %p122 = por %p120, %p121
      %p123 = scmp.ne.s32.totalorder %s109, %s110
      %p124 = scmp.eq.s32.totalorder %s24, 1
      %p125 = por %p123, %p124
      %p127 = scmp.ne.s32.totalorder %s110, %s126
      %p128 = scmp.eq.s32.totalorder %s24, 0
      %p129 = por %p127, %p128
      %p130 = scmp.le.s32.totalorder 1, %s18
      %p131 = scmp.lt.s32.totalorder %s18, 3
      %p132 = pnand %p130, %p131
      %p133 = pneg %p132
      // Predicated region
      $region9: #{tpu_custom_call.1} parent=5 // pred_check
        _
      $region10: #{tpu_custom_call.1} parent=5 // pred_check_branch
        %135 = sbr.rel (%p132) target = $region12
      $region11: #{tpu_custom_call.1} parent=5 // pred_region
        %s136 = ssub.s32 %s18, 1
      $region12: #{tpu_custom_call.1} parent=5 // pred_fallthru
        _
      %p137 = scmp.lt.s32.totalorder %s18, 2
      // Predicated region
      $region13: #{tpu_custom_call.1} parent=5 // pred_check
        %p138 = pneg %p137
      $region14: #{tpu_custom_call.1} parent=5 // pred_check_branch
        %140 = sbr.rel (%p138) target = $region16
      $region15: #{tpu_custom_call.1} parent=5 // pred_region
        // Predicated region
        $region17: #{tpu_custom_call.1} parent=15 // pred_check
          %p141 = pneg %p38
        $region18: #{tpu_custom_call.1} parent=15 // pred_check_branch
          %143 = sbr.rel (%p141) target = $region20
        $region19: #{tpu_custom_call.1} parent=15 // pred_region
          %s144 = sand.u32 %s28, 1
          %s145 = scalar_lea.sflag [#allocation3], %s144
          %s146 = sand.u32 %s28, 1
          %s147 = smul.addr %s146, 128
          %s148 = scalar_lea.vmem [#allocation2], %s147
          %s150 = ssub.s32 2048, 2048
          %151 = vsyncadd %s145, %s150
          %s152 = smul.addr %s18, 16
          %s153 = smul.addr %s152, 128
          %s154 = scalar_lea.hbm %s0, %s153
          %s155 = sshll.u32 %s148, 4
          %s156 = int_to_ptr.vmem [resolvable:$true] %s155
          %161 = dma.hbm_to_vmem [thread:$0]  %s154, 2048, %s156, %s145, 128, 128, 8
        $region20: #{tpu_custom_call.1} parent=15 // pred_fallthru
          _
        // Predicated region
        $region21: #{tpu_custom_call.1} parent=15 // pred_check
          %p162 = pneg %p64
        $region22: #{tpu_custom_call.1} parent=15 // pred_check_branch
          %164 = sbr.rel (%p162) target = $region24
        $region23: #{tpu_custom_call.1} parent=15 // pred_region
          %s165 = sand.u32 %s54, 1
          %s166 = scalar_lea.sflag [#allocation6], %s165
          %s167 = sand.u32 %s54, 1
          %s168 = smul.addr %s167, 8
          %s169 = scalar_lea.vmem [#allocation5], %s168
          %s171 = ssub.s32 128, 128
          %172 = vsyncadd %s166, %s171
          %s173 = smul.addr %s18, 128
          %s174 = scalar_lea.hbm %s1, %s173
          %s176 = sshll.u32 %s169, 4
          %s177 = int_to_ptr.vmem [resolvable:$true] %s176
          %179 = dma.hbm_to_vmem [thread:$0]  %s174, 128, %s177, %s166
        $region24: #{tpu_custom_call.1} parent=15 // pred_fallthru
          _
        // Predicated region
        $region25: #{tpu_custom_call.1} parent=15 // pred_check
          %p180 = pneg %p90
        $region26: #{tpu_custom_call.1} parent=15 // pred_check_branch
          %182 = sbr.rel (%p180) target = $region28
        $region27: #{tpu_custom_call.1} parent=15 // pred_region
          %p183 = scmp.lt.s32.totalorder %s18, 1
          %s184 = scalar_select %p183, %s18, 1
          %s185 = scalar_lea.vmem %s2, %s184
        $region28: #{tpu_custom_call.1} parent=15 // pred_fallthru
          _
      $region16: #{tpu_custom_call.1} parent=5 // pred_fallthru
        _
      %p186 = scmp.le.s32.totalorder 1, %s18
      %p187 = scmp.lt.s32.totalorder %s18, 3
      %p188 = pnand %p186, %p187
      %p189 = pneg %p188
      // Predicated region
      $region29: #{tpu_custom_call.1} parent=5 // pred_check
        _
      $region30: #{tpu_custom_call.1} parent=5 // pred_check_branch
        %191 = sbr.rel (%p188) target = $region32
      $region31: #{tpu_custom_call.1} parent=5 // pred_region
        %s192 = ssub.s32 %s18, 1
        %s193 = sand.u32 %s31, 1
        %s194 = scalar_lea.sflag [#allocation3], %s193
        %s195 = sand.u32 %s31, 1
        %s196 = smul.addr %s195, 128
        %s197 = scalar_lea.vmem [#allocation2], %s196
        // Predicated region
        $region33: #{tpu_custom_call.1} parent=31 // pred_check
          %p198 = pneg %p44
        $region34: #{tpu_custom_call.1} parent=31 // pred_check_branch
          %200 = sbr.rel (%p198) target = $region36
        $region35: #{tpu_custom_call.1} parent=31 // pred_region
          %201 = dma.done %s194, 2048
        $region36: #{tpu_custom_call.1} parent=31 // pred_fallthru
          _
        %s202 = sand.u32 %s57, 1
        %s203 = scalar_lea.sflag [#allocation6], %s202
        %s204 = sand.u32 %s57, 1
        %s205 = smul.addr %s204, 8
        %s206 = scalar_lea.vmem [#allocation5], %s205
        // Predicated region
        $region37: #{tpu_custom_call.1} parent=31 // pred_check
          %p207 = pneg %p70
        $region38: #{tpu_custom_call.1} parent=31 // pred_check_branch
          %209 = sbr.rel (%p207) target = $region40
        $region39: #{tpu_custom_call.1} parent=31 // pred_region
          %210 = dma.done %s203, 128
        $region40: #{tpu_custom_call.1} parent=31 // pred_fallthru
          _
        %s211 = sand.u32 %s31, 1
        %s212 = scalar_lea.sflag [#allocation3], %s211
        %s213 = sand.u32 %s31, 1
        %s214 = smul.addr %s213, 128
        %s215 = scalar_lea.vmem [#allocation2], %s214
        %p216 = pneg %p44
        %p217 = pneg %p41
        %s218 = sand.u32 %s57, 1
        %s219 = scalar_lea.sflag [#allocation6], %s218
        %s220 = sand.u32 %s57, 1
        %s221 = smul.addr %s220, 8
        %s222 = scalar_lea.vmem [#allocation5], %s221
        %p223 = pneg %p70
        %p224 = pneg %p67
        %p225 = scmp.lt.s32.totalorder %s23, 1
        %s226 = scalar_select %p225, %s23, 1
        %s227 = scalar_lea.vmem %s2, %s226
        %p228 = pneg %p96
        %p229 = pneg %p93
        %p230 = pneg %p122
        %p231 = pneg %p119
        %s232 = sand.u32 %s109, 1
        %s233 = scalar_lea.sflag [#allocation4], %s232
        %s234 = sand.u32 %s109, 1
        %s235 = scalar_lea.vmem [#allocation7], %s234
        %p236 = scmp.lt.s32.totalorder %s23, 1
        %s237 = scalar_select %p236, %s23, 1
        %s238 = scalar_lea.vmem %s2, %s237
        %v240 = vld [vmem:[%s197] sm:$0xff]
        %v241 = vld [vmem:[%s197 + $0x8] sm:$0xff]
        %v242 = vld [vmem:[%s197 + $0x10] sm:$0xff]
        %v243 = vld [vmem:[%s197 + $0x18] sm:$0xff]
        %v244 = vld [vmem:[%s197 + $0x20] sm:$0xff]
        %v245 = vld [vmem:[%s197 + $0x28] sm:$0xff]
        %v246 = vld [vmem:[%s197 + $0x30] sm:$0xff]
        %v247 = vld [vmem:[%s197 + $0x38] sm:$0xff]
        %v248 = vld [vmem:[%s197 + $0x40] sm:$0xff]
        %v249 = vld [vmem:[%s197 + $0x48] sm:$0xff]
        %v250 = vld [vmem:[%s197 + $0x50] sm:$0xff]
        %v251 = vld [vmem:[%s197 + $0x58] sm:$0xff]
        %v252 = vld [vmem:[%s197 + $0x60] sm:$0xff]
        %v253 = vld [vmem:[%s197 + $0x68] sm:$0xff]
        %v254 = vld [vmem:[%s197 + $0x70] sm:$0xff]
        %v255 = vld [vmem:[%s197 + $0x78] sm:$0xff]
        %v256 = vld [vmem:[%s206] sm:$0xff]
        %v257 = vld [vmem:[%s238] sm:$0x1]
        %v258 = vmul.f32 %v240, %v240
        %v259 = vmul.f32 %v241, %v241
        %v260 = vmul.f32 %v242, %v242
        %v261 = vmul.f32 %v243, %v243
        %v262 = vmul.f32 %v244, %v244
        %v263 = vmul.f32 %v245, %v245
        %v264 = vmul.f32 %v246, %v246
        %v265 = vmul.f32 %v247, %v247
        %v266 = vmul.f32 %v248, %v248
        %v267 = vmul.f32 %v249, %v249
        %v268 = vmul.f32 %v250, %v250
        %v269 = vmul.f32 %v251, %v251
        %v270 = vmul.f32 %v252, %v252
        %v271 = vmul.f32 %v253, %v253
        %v272 = vmul.f32 %v254, %v254
        %v273 = vmul.f32 %v255, %v255
        %274 = vadd.xlane.f32.xlu0 %v258
        %v275 = vpop.xlane.xlu0 %274
        %276 = vadd.xlane.f32.xlu0 %v259
        %v277 = vpop.xlane.xlu0 %276
        %278 = vadd.xlane.f32.xlu0 %v260
        %v279 = vpop.xlane.xlu0 %278
        %280 = vadd.xlane.f32.xlu0 %v261
        %v281 = vpop.xlane.xlu0 %280
        %282 = vadd.xlane.f32.xlu0 %v262
        %v283 = vpop.xlane.xlu0 %282
        %284 = vadd.xlane.f32.xlu0 %v263
        %v285 = vpop.xlane.xlu0 %284
        %286 = vadd.xlane.f32.xlu0 %v264
        %v287 = vpop.xlane.xlu0 %286
        %288 = vadd.xlane.f32.xlu0 %v265
        %v289 = vpop.xlane.xlu0 %288
        %290 = vadd.xlane.f32.xlu0 %v266
        %v291 = vpop.xlane.xlu0 %290
        %292 = vadd.xlane.f32.xlu0 %v267
        %v293 = vpop.xlane.xlu0 %292
        %294 = vadd.xlane.f32.xlu0 %v268
        %v295 = vpop.xlane.xlu0 %294
        %296 = vadd.xlane.f32.xlu0 %v269
        %v297 = vpop.xlane.xlu0 %296
        %298 = vadd.xlane.f32.xlu0 %v270
        %v299 = vpop.xlane.xlu0 %298
        %300 = vadd.xlane.f32.xlu0 %v271
        %v301 = vpop.xlane.xlu0 %300
        %302 = vadd.xlane.f32.xlu0 %v272
        %v303 = vpop.xlane.xlu0 %302
        %304 = vadd.xlane.f32.xlu0 %v273
        %v305 = vpop.xlane.xlu0 %304
        %vm306 = vcmp.gt.f32.partialorder %v275, 0.0
        %vm307 = vcmp.gt.f32.partialorder %v277, 0.0
        %vm308 = vcmp.gt.f32.partialorder %v279, 0.0
        %vm309 = vcmp.gt.f32.partialorder %v281, 0.0
        %vm310 = vcmp.gt.f32.partialorder %v283, 0.0
        %vm311 = vcmp.gt.f32.partialorder %v285, 0.0
        %vm312 = vcmp.gt.f32.partialorder %v287, 0.0
        %vm313 = vcmp.gt.f32.partialorder %v289, 0.0
        %vm314 = vcmp.gt.f32.partialorder %v291, 0.0
        %vm315 = vcmp.gt.f32.partialorder %v293, 0.0
        %vm316 = vcmp.gt.f32.partialorder %v295, 0.0
        %vm317 = vcmp.gt.f32.partialorder %v297, 0.0
        %vm318 = vcmp.gt.f32.partialorder %v299, 0.0
        %vm319 = vcmp.gt.f32.partialorder %v301, 0.0
        %vm320 = vcmp.gt.f32.partialorder %v303, 0.0
        %vm321 = vcmp.gt.f32.partialorder %v305, 0.0
        %v322 = vrsqrt.pop %v275
        %v323 = vrsqrt.pop %v277
        %v324 = vrsqrt.pop %v279
        %v325 = vrsqrt.pop %v281
        %v326 = vrsqrt.pop %v283
        %v327 = vrsqrt.pop %v285
        %v328 = vrsqrt.pop %v287
        %v329 = vrsqrt.pop %v289
        %v330 = vrsqrt.pop %v291
        %v331 = vrsqrt.pop %v293
        %v332 = vrsqrt.pop %v295
        %v333 = vrsqrt.pop %v297
        %v334 = vrsqrt.pop %v299
        %v335 = vrsqrt.pop %v301
        %v336 = vrsqrt.pop %v303
        %v337 = vrsqrt.pop %v305
        %v338 = vsel %vm306, %v322, 0.0
        %v339 = vsel %vm307, %v323, 0.0
        %v340 = vsel %vm308, %v324, 0.0
        %v341 = vsel %vm309, %v325, 0.0
        %v342 = vsel %vm310, %v326, 0.0
        %v343 = vsel %vm311, %v327, 0.0
        %v344 = vsel %vm312, %v328, 0.0
        %v345 = vsel %vm313, %v329, 0.0
        %v346 = vsel %vm314, %v330, 0.0
        %v347 = vsel %vm315, %v331, 0.0
        %v348 = vsel %vm316, %v332, 0.0
        %v349 = vsel %vm317, %v333, 0.0
        %v350 = vsel %vm318, %v334, 0.0
        %v351 = vsel %vm319, %v335, 0.0
        %v352 = vsel %vm320, %v336, 0.0
        %v353 = vsel %vm321, %v337, 0.0
        %v354 = vmul.f32 %v240, %v338
        %v355 = vmul.f32 %v241, %v339
        %v356 = vmul.f32 %v242, %v340
        %v357 = vmul.f32 %v243, %v341
        %v358 = vmul.f32 %v244, %v342
        %v359 = vmul.f32 %v245, %v343
        %v360 = vmul.f32 %v246, %v344
        %v361 = vmul.f32 %v247, %v345
        %v362 = vmul.f32 %v248, %v346
        %v363 = vmul.f32 %v249, %v347
        %v364 = vmul.f32 %v250, %v348
        %v365 = vmul.f32 %v251, %v349
        %v366 = vmul.f32 %v252, %v350
        %v367 = vmul.f32 %v253, %v351
        %v368 = vmul.f32 %v254, %v352
        %v369 = vmul.f32 %v255, %v353
        %v370 = vpack.c.bf16 %v355, %v354
        %v371 = vpack.c.bf16 %v357, %v356
        %v372 = vpack.c.bf16 %v359, %v358
        %v373 = vpack.c.bf16 %v361, %v360
        %v374 = vpack.c.bf16 %v363, %v362
        %v375 = vpack.c.bf16 %v365, %v364
        %v376 = vpack.c.bf16 %v367, %v366
        %v377 = vpack.c.bf16 %v369, %v368
        %v378 = vmul.f32 %v256, %v256
        %379 = vadd.xlane.f32.xlu0 %v378
        %v380 = vpop.xlane.xlu0 %379
        %vm381 = vcmp.gt.f32.partialorder %v380, 0.0
        %v382 = vrsqrt.pop %v380
        %v383 = vsel %vm381, %v382, 0.0
        %v384 = vmul.f32 %v256, %v383
        %v385 = vpack.c.bf16 %v384, %v384
        %386 = vmatprep.subr.bf16.mxu0 0
        %387 = vmatpush1.bf16.xpose.msra.mxu0 %v370
        %388 = vmatprep.subr.bf16.mxu0 0
        %389 = vmatpush1.bf16.xpose.msra.mxu0 %v371
        %390 = vmatprep.subr.bf16.mxu0 0
        %391 = vmatpush1.bf16.xpose.msra.mxu0 %v372
        %392 = vmatprep.subr.bf16.mxu0 0
        %393 = vmatpush1.bf16.xpose.msra.mxu0 %v373
        %394 = vmatprep.subr.bf16.mxu0 0
        %395 = vmatpush1.bf16.xpose.msra.mxu0 %v374
        %396 = vmatprep.subr.bf16.mxu0 0
        %397 = vmatpush1.bf16.xpose.msra.mxu0 %v375
        %398 = vmatprep.subr.bf16.mxu0 0
        %399 = vmatpush1.bf16.xpose.msra.mxu0 %v376
        %400 = vmatprep.subr.bf16.mxu0 0
        %401 = vmatpush1.bf16.xpose.msra.mxu0 %v377
        %402 = vmatprep.subr.bf16.mxu0 0
        %403 = vmatpush1.bf16.xpose.msra.mxu0 0
        %404 = vmatprep.subr.bf16.mxu0 0
        %405 = vmatpush1.bf16.xpose.msra.mxu0 0
        %406 = vmatprep.subr.bf16.mxu0 0
        %407 = vmatpush1.bf16.xpose.msra.mxu0 0
        %408 = vmatprep.subr.bf16.mxu0 0
        %409 = vmatpush1.bf16.xpose.msra.mxu0 0
        %410 = vmatprep.subr.bf16.mxu0 0
        %411 = vmatpush1.bf16.xpose.msra.mxu0 0
        %412 = vmatprep.subr.bf16.mxu0 0
        %413 = vmatpush1.bf16.xpose.msra.mxu0 0
        %414 = vmatprep.subr.bf16.mxu0 0
        %415 = vmatpush1.bf16.xpose.msra.mxu0 0
        %416 = vmatprep.subr.bf16.mxu0 0
        %417 = vmatpush1.bf16.xpose.msra.mxu0 0
        %418 = vmatprep.mubr.bf16.mxu0 0
        %419 = vmatmul.mubr.bf16.gmra.mrb[0].mxu0 %v385
        %v420 = vpop.f32.mrb[0].mxu0
        %v421 = vadd.f32 0.0, %v420
        %v422 = vpop.f32.mrb[0].mxu0
        %v423 = vpop.f32.mrb[0].mxu0
        %v424 = vpop.f32.mrb[0].mxu0
        %425 = vdwg.mxu0
        %vm426 = vcmp.gt.f32.partialorder %v421, 0.95
        %v427 = vsel %vm426, 1, 0
        %v428 = vcvt.s32.f32 %v427
        %v429 = vrot.slane %v428, 4
        %v430 = vadd.f32 %v428, %v429
        %v431 = vrot.slane %v430, 2
        %v432 = vadd.f32 %v430, %v431
        %v433 = vrot.slane %v432, 1
        %v434 = vadd.f32 %v432, %v433
        %v435 = vadd.f32 %v434, %v257
        %v436 = vmul.f32 %v435, -1e+12
        %437 = vst [vmem:[%s235] sm:$0x1] %v436
        %s438 = sand.u32 %s109, 1
        %s439 = scalar_lea.sflag [#allocation4], %s438
        %s440 = sand.u32 %s109, 1
        %s441 = scalar_lea.vmem [#allocation7], %s440
        // Predicated region
        $region41: #{tpu_custom_call.1} parent=31 // pred_check
          %p442 = pneg %p119
        $region42: #{tpu_custom_call.1} parent=31 // pred_check_branch
          %444 = sbr.rel (%p442) target = $region44
        $region43: #{tpu_custom_call.1} parent=31 // pred_region
          %s446 = ssub.s32 16, 16
          %447 = vsyncadd %s439, %s446
          %s448 = smul.addr %s23, 16
          %s449 = scalar_lea.hbm %s3, %s448
          %s451 = sshll.u32 %s441, 4
          %s452 = int_to_ptr.vmem [resolvable:$true] %s451
          %454 = dma.vmem_to_hbm [thread:$0]  %s452, 16, %s449, %s439
        $region44: #{tpu_custom_call.1} parent=31 // pred_fallthru
          _
      $region32: #{tpu_custom_call.1} parent=5 // pred_fallthru
        _
      %p455 = scmp.le.s32.totalorder 2, %s18
      // Predicated region
      $region45: #{tpu_custom_call.1} parent=5 // pred_check
        %p456 = pneg %p455
      $region46: #{tpu_custom_call.1} parent=5 // pred_check_branch
        %458 = sbr.rel (%p456) target = $region48
      $region47: #{tpu_custom_call.1} parent=5 // pred_region
        %s459 = ssub.s32 %s18, 2
        // Predicated region
        $region49: #{tpu_custom_call.1} parent=47 // pred_check
          %p460 = pneg %p125
        $region50: #{tpu_custom_call.1} parent=47 // pred_check_branch
          %462 = sbr.rel (%p460) target = $region52
        $region51: #{tpu_custom_call.1} parent=47 // pred_region
          %s463 = sand.u32 %s110, 1
          %s464 = scalar_lea.sflag [#allocation4], %s463
          %s465 = sand.u32 %s110, 1
          %s466 = scalar_lea.vmem [#allocation7], %s465
          %467 = dma.done %s464, 16
        $region52: #{tpu_custom_call.1} parent=47 // pred_fallthru
          _
      $region48: #{tpu_custom_call.1} parent=5 // pred_fallthru
        _
    $region6: #{tpu_custom_call.1} parent=1 // loop_footer
      %s22 = sadd.s32 1, %s18
    $region7: #{tpu_custom_call.1} parent=1 // loop_footer_branch
      %17 = sbr.rel target = $region3
    $region8: #{tpu_custom_call.1} parent=1 // loop_exit
      _
    %468 = vsyncpa [#allocation3], 1
    %s469 = scalar_lea.sflag [#allocation3], 1
    %470 = vsyncpa %s469, 1
    %471 = vsyncpa [#allocation6], 1
    %s472 = scalar_lea.sflag [#allocation6], 1
    %473 = vsyncpa %s472, 1
    %474 = vsyncpa [#allocation4], 1
    %s475 = scalar_lea.sflag [#allocation4], 1
    %476 = vsyncpa %s475, 1

</llo_original>
